<compile_context>
chip_gen: v7x
topology: tpu7x:2x2x1
jax: 0.10.0
libtpu: 0.0.40
codegen_flags: <defaults>
</compile_context>

<pallas_src>
import jax
import jax.numpy as jnp
from jax.experimental import pallas as pl
from jax.experimental.pallas import tpu as pltpu


_VPU_CHANNEL_LIMIT = 32                 # below this, skip the MXU entirely
_VMEM_LIMIT_BYTES = 32 * 1024 * 1024    # safe scoped VMEM limit on v5e/v6e/v7x
_TILE_VMEM_BUDGET = 20 * 1024 * 1024    # tile sizing budget (leaves headroom)


def _conv1x1_mxu_kernel(x_ref, w_ref, o_ref):
    # x_ref: (C_in, TP)   w_ref: (C_out, C_in)   o_ref: (C_out, TP)
    o_ref[...] = jnp.dot(
        w_ref[...], x_ref[...], preferred_element_type=jnp.float32
    ).astype(o_ref.dtype)


def _conv1x1_vpu_kernel(x_ref, w_ref, o_ref):
    # Small-channel path: unrolled channel mix on the VPU over the lane-dense
    # spatial axis.  A (C_out<=32, C_in<=32) contraction wastes the MXU; a few
    # broadcasted FMAs per lane keep this purely bandwidth-limited.
    x = x_ref[...].astype(jnp.float32)      # (C_in, TP)
    w = w_ref[...].astype(jnp.float32)      # (C_out, C_in)
    c_in = x_ref.shape[0]
    acc = w[:, 0:1] * x[0:1, :]             # (C_out,1)*(1,TP) -> (C_out,TP)
    for c in range(1, c_in):
        acc = acc + w[:, c:c + 1] * x[c:c + 1, :]
    o_ref[...] = acc.astype(o_ref.dtype)


def _pick_spatial_tile(p, c_in, c_out, dtype_bytes):
    """Largest lane-aligned spatial tile that fits the VMEM budget."""
    if p <= 1024:
        return p                             # full last dim is always legal
    # double-buffered input + output tiles, weight stays resident
    per_lane = 2 * (c_in + c_out) * dtype_bytes * 2
    budget = max(_TILE_VMEM_BUDGET - c_in * c_out * dtype_bytes, per_lane * 128)
    tp = min(2048, budget // per_lane, p)
    tp = max(128, (int(tp) // 128) * 128)    # multiple of 128 lanes
    return int(tp)


def conv_downsample(x, weight, stride):
    """1x1 conv, bias=False, groups=1, stride `stride` (NCHW, PyTorch weights).

    # TODO(synk): `stride` must be a static Python int (or pair of ints); a
    # traced (runtime) stride has no clean strided-slice equivalent under jit.
    """
    N, C_in, H, W = x.shape
    C_out = weight.shape[0]

    if isinstance(stride, (tuple, list)):
        sh, sw = int(stride[0]), int(stride[1])
    else:
        sh = sw = int(stride)

    # kernel_size=1 conv with stride s == pick every s-th pixel.  No transpose:
    # NCHW is already channel-major over the spatial axis we flatten.
    xs = x if (sh == 1 and sw == 1) else x[:, :, ::sh, ::sw]
    H_out, W_out = xs.shape[2], xs.shape[3]
    P = H_out * W_out

    x3d = xs.reshape(N, C_in, P)                          # (N, C_in, P)
    w2d = weight.reshape(C_out, C_in)                     # (C_out, C_in) — no .T

    dtype_bytes = jnp.dtype(x.dtype).itemsize
    TP = _pick_spatial_tile(P, C_in, C_out, dtype_bytes)
    grid = (N, pl.cdiv(P, TP))

    small = (C_in <= _VPU_CHANNEL_LIMIT) and (C_out <= _VPU_CHANNEL_LIMIT)
    kernel = _conv1x1_vpu_kernel if small else _conv1x1_mxu_kernel

    cost = pl.CostEstimate(
        flops=2 * N * P * C_in * C_out,
        transcendentals=0,
        bytes_accessed=(N * P * C_in + C_in * C_out + N * P * C_out) * dtype_bytes,
    )

    out3d = pl.pallas_call(
        kernel,
        out_shape=jax.ShapeDtypeStruct((N, C_out, P), x.dtype),
        grid_spec=pltpu.PrefetchScalarGridSpec(
            num_scalar_prefetch=0,
            grid=grid,
            in_specs=[
                # per-batch, per-spatial-tile slab of activations (lane = spatial)
                pl.BlockSpec((None, C_in, TP), lambda n, j: (n, 0, j)),
                # weights: small, resident across the whole grid (index never changes)
                pl.BlockSpec((C_out, C_in), lambda n, j: (0, 0)),
            ],
            out_specs=pl.BlockSpec((None, C_out, TP), lambda n, j: (n, 0, j)),
        ),
        compiler_params=pltpu.CompilerParams(
            dimension_semantics=("parallel", "parallel"),
            vmem_limit_bytes=_VMEM_LIMIT_BYTES,
        ),
        cost_estimate=cost,
    )(x3d, w2d)

    # (N, C_out, P) -> NCHW directly, no transpose.
    return out3d.reshape(N, C_out, H_out, W_out)


def _reference(x, weight, stride):
    C_out = weight.shape[0]
    C_in = weight.shape[1]
    xs = x[:, :, ::stride, ::stride]
    return jnp.einsum(
        "nchw,oc->nohw",
        xs,
        weight.reshape(C_out, C_in),
        precision=jax.lax.Precision.HIGHEST,
    )


if __name__ == "__main__":
    key = jax.random.PRNGKey(0)
    k_x, k_w, k_x2, k_w2 = jax.random.split(key, 4)

    # --- Test 1: small channels (VPU path), stride 2 ---------------------
    N, C_in, H, W = 2, 4, 16, 16
    C_out, stride = 8, 2

    x = jax.random.normal(k_x, (N, C_in, H, W), dtype=jnp.float32)
    # nn.Conv2d(inplane, outplane, kernel_size=1, bias=False) weight shape:
    weight = jax.random.normal(k_w, (C_out, C_in, 1, 1), dtype=jnp.float32) * 0.1

    out = conv_downsample(x, weight, stride)
    out = jax.block_until_ready(out)

    ref = _reference(x, weight, stride)
    assert out.shape == (N, C_out, H // stride, W // stride), out.shape
    assert jnp.allclose(out, ref, atol=1e-5, rtol=1e-5), float(
        jnp.max(jnp.abs(out - ref))
    )

    # --- Test 2: larger channels (MXU path), stride 1 ---------------------
    N2, C_in2, H2, W2 = 2, 64, 16, 16
    C_out2, stride2 = 128, 1

    x2 = jax.random.normal(k_x2, (N2, C_in2, H2, W2), dtype=jnp.float32)
    w2 = jax.random.normal(k_w2, (C_out2, C_in2, 1, 1), dtype=jnp.float32) * 0.05

    out2 = conv_downsample(x2, w2, stride2)
    out2 = jax.block_until_ready(out2)

    ref2 = _reference(x2, w2, stride2)
    assert out2.shape == (N2, C_out2, H2, W2), out2.shape
    assert jnp.allclose(out2, ref2, atol=1e-3, rtol=1e-3), float(
        jnp.max(jnp.abs(out2 - ref2))
    )

    print("KERNEL_OK")
</pallas_src>

<mosaic_0001>
module attributes {stable_mosaic.version = 11 : i64} {
  func.func @_conv1x1_vpu_kernel(%arg0: i32, %arg1: i32, %arg2: memref<1x4x64xf32, #tpu.memory_space<vmem>>, %arg3: memref<8x4xf32, #tpu.memory_space<vmem>>, %arg4: memref<1x8x64xf32, #tpu.memory_space<vmem>>) attributes {dimension_semantics = [#tpu.dimension_semantics<parallel>, #tpu.dimension_semantics<parallel>], iteration_bounds = array<i64: 2, 1>, scalar_prefetch = 0 : i64, scratch_operands = 0 : i64, tpu.core_type = #tpu.core_type<tc>, window_params = [{transform_indices = @transform_0, window_bounds = array<i64: 1, 4, 64>}, {pipeline_mode = #tpu.pipeline_mode<synchronous>, transform_indices = @transform_1, window_bounds = array<i64: 8, 4>}, {transform_indices = @transform_2, window_bounds = array<i64: 1, 8, 64>}]} {
    %c0 = arith.constant 0 : index
    %c0_0 = arith.constant 0 : index
    %c0_1 = arith.constant 0 : index
    %0 = vector.load %arg2[%c0, %c0_0, %c0_1] : memref<1x4x64xf32, #tpu.memory_space<vmem>>, vector<1x4x64xf32>
    %1 = vector.shape_cast %0 : vector<1x4x64xf32> to vector<4x64xf32>
    %c0_2 = arith.constant 0 : index
    %c0_3 = arith.constant 0 : index
    %2 = vector.load %arg3[%c0_2, %c0_3] : memref<8x4xf32, #tpu.memory_space<vmem>>, vector<8x4xf32>
    %3 = vector.extract_strided_slice %2 {offsets = [0, 0], sizes = [8, 1], strides = [1, 1]} : vector<8x4xf32> to vector<8x1xf32>
    %4 = vector.extract_strided_slice %1 {offsets = [0, 0], sizes = [1, 64], strides = [1, 1]} : vector<4x64xf32> to vector<1x64xf32>
    %5 = vector.broadcast %3 : vector<8x1xf32> to vector<8x64xf32>
    %6 = vector.broadcast %4 : vector<1x64xf32> to vector<8x64xf32>
    %7 = arith.mulf %5, %6 : vector<8x64xf32>
    %8 = vector.extract_strided_slice %2 {offsets = [0, 1], sizes = [8, 1], strides = [1, 1]} : vector<8x4xf32> to vector<8x1xf32>
    %9 = vector.extract_strided_slice %1 {offsets = [1, 0], sizes = [1, 64], strides = [1, 1]} : vector<4x64xf32> to vector<1x64xf32>
    %10 = vector.broadcast %8 : vector<8x1xf32> to vector<8x64xf32>
    %11 = vector.broadcast %9 : vector<1x64xf32> to vector<8x64xf32>
    %12 = arith.mulf %10, %11 : vector<8x64xf32>
    %13 = arith.addf %7, %12 : vector<8x64xf32>
    %14 = vector.extract_strided_slice %2 {offsets = [0, 2], sizes = [8, 1], strides = [1, 1]} : vector<8x4xf32> to vector<8x1xf32>
    %15 = vector.extract_strided_slice %1 {offsets = [2, 0], sizes = [1, 64], strides = [1, 1]} : vector<4x64xf32> to vector<1x64xf32>
    %16 = vector.broadcast %14 : vector<8x1xf32> to vector<8x64xf32>
    %17 = vector.broadcast %15 : vector<1x64xf32> to vector<8x64xf32>
    %18 = arith.mulf %16, %17 : vector<8x64xf32>
    %19 = arith.addf %13, %18 : vector<8x64xf32>
    %20 = vector.extract_strided_slice %2 {offsets = [0, 3], sizes = [8, 1], strides = [1, 1]} : vector<8x4xf32> to vector<8x1xf32>
    %21 = vector.extract_strided_slice %1 {offsets = [3, 0], sizes = [1, 64], strides = [1, 1]} : vector<4x64xf32> to vector<1x64xf32>
    %22 = vector.broadcast %20 : vector<8x1xf32> to vector<8x64xf32>
    %23 = vector.broadcast %21 : vector<1x64xf32> to vector<8x64xf32>
    %24 = arith.mulf %22, %23 : vector<8x64xf32>
    %25 = arith.addf %19, %24 : vector<8x64xf32>
    %c0_4 = arith.constant 0 : index
    %c0_5 = arith.constant 0 : index
    %c0_6 = arith.constant 0 : index
    %26 = vector.load %arg4[%c0_4, %c0_5, %c0_6] : memref<1x8x64xf32, #tpu.memory_space<vmem>>, vector<1x8x64xf32>
    %27 = vector.shape_cast %26 : vector<1x8x64xf32> to vector<8x64xf32>
    %28 = vector.shape_cast %25 : vector<8x64xf32> to vector<1x8x64xf32>
    tpu.vector_store %arg4[%c0_4, %c0_5, %c0_6], %28 {strides = array<i32>} : memref<1x8x64xf32, #tpu.memory_space<vmem>>, vector<1x8x64xf32>,
    return
  }
  func.func @transform_0(%arg0: i32, %arg1: i32) -> (i32, i32, i32) {
    %c0_i32 = arith.constant 0 : i32
    %c0_i32_0 = arith.constant 0 : i32
    return %arg0, %c0_i32, %arg1 : i32, i32, i32
  }
  func.func @transform_1(%arg0: i32, %arg1: i32) -> (i32, i32) {
    %c0_i32 = arith.constant 0 : i32
    %c0_i32_0 = arith.constant 0 : i32
    %c0_i32_1 = arith.constant 0 : i32
    return %c0_i32, %c0_i32_0 : i32, i32
  }
  func.func @transform_2(%arg0: i32, %arg1: i32) -> (i32, i32, i32) {
    %c0_i32 = arith.constant 0 : i32
    %c0_i32_0 = arith.constant 0 : i32
    return %arg0, %c0_i32, %arg1 : i32, i32, i32
  }
}

</mosaic_0001>

<llo_original>
// kernel: tpu_custom_call.1
$region0: #{tpu_custom_call.1}
  #allocation0 [shape = 'u32[]', space=smem, size = 0x4, offset = 0x4, fixed_abs, tag = 'smem constant byte address 0x4 - core index']
  #allocation1 [shape = 'u32[144,128]{1,0:T(1,128)}', space=vmem, size = 0x12000, scoped, tag = 'internal scratch']
  %s0 = inlined_call_operand.vmem [shape: f32[2,4,64], index: 0, kind: input, shape index: {}]
  %s1 = inlined_call_operand.vmem [shape: f32[8,4], index: 1, kind: input, shape index: {}]
  %s2 = inlined_call_operand.hbm [shape: f32[2,8,64], index: 2, kind: output, shape index: {}]
  %s3 = sld [smem:[#allocation0]]
  $region41: #{tpu_custom_call.1} parent=0
    _
  %s5 = ssub.s32 1, %s3
  %s6 = scalar_select 0, %s5, %s3
  $region1: #{tpu_custom_call.1} parent=0
    #allocation2 [shape = 'u8[8192]{0}', space=vmem, size = 0x2000, scoped, tag = 'output window, operand 0']
    #allocation3 [shape = 's32[2]{0}', space=sflag, size = 0x8, scoped, tag = 'scoped memory for tpu_custom_call.1']
    %7 = vsyncpa [#allocation3], 0
    %s8 = scalar_lea.sflag [#allocation3], 1
    %9 = vsyncpa %s8, 0
    loop: start=0, step=1, limit=4
    $region2: #{tpu_custom_call.1} parent=1 // loop_pre_header
      _
    $region3: #{tpu_custom_call.1} parent=1 // loop_header
      %s11 = sphi 0, %s15
      %p12 = scmp.ge.s32.totalorder %s11, 4
      %s18 = sphi 0, %s30
      %s19 = sphi 0, %s26
      %s20 = sphi 0, %s18
      %s21 = sphi 0, %s19
      %s22 = sphi 0, %s20
      %s23 = sphi 0, %s21
      %s35 = sphi 0, %s37
      %s38 = sphi 0, %s35
      %s39 = sphi 0, %s38
      %s55 = sphi 0, %s39
      %s59 = sphi 0, %s59
      %s61 = sphi 0, %s59
      %s62 = sphi 0, %s61
      %s76 = sphi 0, %s62
      %s84 = sphi 0, %s86
      %s87 = sphi 0, %s84
      %s88 = sphi 0, %s87
      %s104 = sphi 0, %s88
    $region4: #{tpu_custom_call.1} parent=1 // loop_header_branch
      %14 = sbr.rel (%p12) target = $region8
    $region5: #{tpu_custom_call.1} parent=1 // loop_body
      %s16 = ssub.s32 %s11, 1
      %s17 = ssub.s32 %s11, 2
      %s24 = sadd.s32 1, %s19
      %p25 = scmp.ge.s32.totalorder %s24, 1
      %s26 = scalar_select %p25, 0, %s24
      %s27 = sadd.s32 1, %s18
      %s28 = scalar_select %p25, %s27, %s18
      %p29 = scmp.ge.s32.totalorder %s28, 2
      %s30 = scalar_select %p29, 0, %s28
      %s31 = ssub.s32 %s18, %s30
      %s32 = ssub.s32 %s19, %s26
      %s33 = sor.u32 %s31, %s32
      %p34 = scmp.eq.s32.totalorder %s33, 0
      %s36 = sadd.s32 %s35, 1
      %s37 = scalar_select %p34, %s35, %s36
      %p40 = pneg %p34
      %p41 = scmp.eq.s32.totalorder %s11, 1
      %p42 = por %p40, %p41
      %p43 = scmp.ne.s32.totalorder %s35, %s38
      %p44 = scmp.eq.s32.totalorder %s11, 0
      %p45 = por %p43, %p44
      %p46 = scmp.ne.s32.totalorder %s35, %s38
      %p47 = scmp.eq.s32.totalorder %s16, 1
      %p48 = por %p46, %p47
      %p49 = scmp.ne.s32.totalorder %s38, %s39
      %p50 = scmp.eq.s32.totalorder %s16, 0
      %p51 = por %p49, %p50
      %p52 = scmp.ne.s32.totalorder %s38, %s39
      %p53 = scmp.eq.s32.totalorder %s17, 1
      %p54 = por %p52, %p53
      %p56 = scmp.ne.s32.totalorder %s39, %s55
      %p57 = scmp.eq.s32.totalorder %s17, 0
      %p58 = por %p56, %p57
      %s60 = sadd.s32 %s59, 1
      %p63 = scmp.eq.s32.totalorder %s11, 1
      %p64 = scmp.ne.s32.totalorder %s59, %s61
      %p65 = scmp.eq.s32.totalorder %s11, 0
      %p66 = por %p64, %p65
      %p67 = scmp.ne.s32.totalorder %s59, %s61
      %p68 = scmp.eq.s32.totalorder %s16, 1
      %p69 = por %p67, %p68
      %p70 = scmp.ne.s32.totalorder %s61, %s62
      %p71 = scmp.eq.s32.totalorder %s16, 0
      %p72 = por %p70, %p71
      %p73 = scmp.ne.s32.totalorder %s61, %s62
      %p74 = scmp.eq.s32.totalorder %s17, 1
      %p75 = por %p73, %p74
      %p77 = scmp.ne.s32.totalorder %s62, %s76
      %p78 = scmp.eq.s32.totalorder %s17, 0
      %p79 = por %p77, %p78
      %s80 = ssub.s32 %s18, %s30
      %s81 = ssub.s32 %s19, %s26
      %s82 = sor.u32 %s80, %s81
      %p83 = scmp.eq.s32.totalorder %s82, 0
      %s85 = sadd.s32 %s84, 1
      %s86 = scalar_select %p83, %s84, %s85
      %p89 = pneg %p83
      %p90 = scmp.eq.s32.totalorder %s11, 1
      %p91 = por %p89, %p90
      %p92 = scmp.ne.s32.totalorder %s84, %s87
      %p93 = scmp.eq.s32.totalorder %s11, 0
      %p94 = por %p92, %p93
      %p95 = scmp.ne.s32.totalorder %s84, %s87
      %p96 = scmp.eq.s32.totalorder %s16, 1
      %p97 = por %p95, %p96
      %p98 = scmp.ne.s32.totalorder %s87, %s88
      %p99 = scmp.eq.s32.totalorder %s16, 0
      %p100 = por %p98, %p99
      %p101 = scmp.ne.s32.totalorder %s87, %s88
      %p102 = scmp.eq.s32.totalorder %s17, 1
      %p103 = por %p101, %p102
      %p105 = scmp.ne.s32.totalorder %s88, %s104
      %p106 = scmp.eq.s32.totalorder %s17, 0
      %p107 = por %p105, %p106
      %p108 = scmp.le.s32.totalorder 1, %s11
      %p109 = scmp.lt.s32.totalorder %s11, 3
      %p110 = pnand %p108, %p109
      %p111 = pneg %p110
      // Predicated region
      $region9: #{tpu_custom_call.1} parent=5 // pred_check
        _
      $region10: #{tpu_custom_call.1} parent=5 // pred_check_branch
        %113 = sbr.rel (%p110) target = $region12
      $region11: #{tpu_custom_call.1} parent=5 // pred_region
        %s114 = ssub.s32 %s11, 1
        // Predicated region
        $region13: #{tpu_custom_call.1} parent=11 // pred_check
          %p115 = pneg %p72
        $region14: #{tpu_custom_call.1} parent=11 // pred_check_branch
          %117 = sbr.rel (%p115) target = $region16
        $region15: #{tpu_custom_call.1} parent=11 // pred_region
          _
        $region16: #{tpu_custom_call.1} parent=11 // pred_fallthru
          _
      $region12: #{tpu_custom_call.1} parent=5 // pred_fallthru
        _
      %p118 = scmp.lt.s32.totalorder %s11, 2
      // Predicated region
      $region17: #{tpu_custom_call.1} parent=5 // pred_check
        %p119 = pneg %p118
      $region18: #{tpu_custom_call.1} parent=5 // pred_check_branch
        %121 = sbr.rel (%p119) target = $region20
      $region19: #{tpu_custom_call.1} parent=5 // pred_region
        // Predicated region
        $region21: #{tpu_custom_call.1} parent=19 // pred_check
          %p122 = pneg %p45
        $region22: #{tpu_custom_call.1} parent=19 // pred_check_branch
          %124 = sbr.rel (%p122) target = $region24
        $region23: #{tpu_custom_call.1} parent=19 // pred_region
          %p125 = scmp.lt.s32.totalorder %s18, 1
          %s126 = scalar_select %p125, %s18, 1
          %p127 = scmp.lt.s32.totalorder %s19, 0
          %s128 = scalar_select %p127, %s19, 0
          %s129 = sadd.s32 %s128, %s126
          %s130 = smul.addr %s129, 4
          %s131 = scalar_lea.vmem %s0, %s130
        $region24: #{tpu_custom_call.1} parent=19 // pred_fallthru
          _
      $region20: #{tpu_custom_call.1} parent=5 // pred_fallthru
        _
      %p132 = scmp.le.s32.totalorder 1, %s11
      %p133 = scmp.lt.s32.totalorder %s11, 3
      %p134 = pnand %p132, %p133
      %p135 = pneg %p134
      // Predicated region
      $region25: #{tpu_custom_call.1} parent=5 // pred_check
        _
      $region26: #{tpu_custom_call.1} parent=5 // pred_check_branch
        %137 = sbr.rel (%p134) target = $region28
      $region27: #{tpu_custom_call.1} parent=5 // pred_region
        %s138 = ssub.s32 %s11, 1
        %p139 = scmp.lt.s32.totalorder %s20, 1
        %s140 = scalar_select %p139, %s20, 1
        %p141 = scmp.lt.s32.totalorder %s21, 0
        %s142 = scalar_select %p141, %s21, 0
        %s143 = sadd.s32 %s142, %s140
        %s144 = smul.addr %s143, 4
        %s145 = scalar_lea.vmem %s0, %s144
        %p146 = pneg %p51
        %p147 = pneg %p48
        %p148 = pneg %p72
        %p149 = pneg %p69
        %p150 = pneg %p100
        %p151 = pneg %p97
        %s152 = sand.u32 %s87, 1
        %s153 = scalar_lea.sflag [#allocation3], %s152
        %s154 = sand.u32 %s87, 1
        %s155 = smul.addr %s154, 8
        %s156 = scalar_lea.vmem [#allocation2], %s155
        %p157 = scmp.lt.s32.totalorder %s20, 1
        %s158 = scalar_select %p157, %s20, 1
        %p159 = scmp.lt.s32.totalorder %s21, 0
        %s160 = scalar_select %p159, %s21, 0
        %s161 = sadd.s32 %s160, %s158
        %s162 = smul.addr %s161, 4
        %s163 = scalar_lea.vmem %s0, %s162
        %v164 = vld [vmem:[%s163] sm:$0xf]
        %v165 = vld [vmem:[%s1] sm:$0xff]
        %167 = vset.pattern.permute.xlu0 0
        %168 = vperm.xlu0 %167, %v165
        %v169 = vpop.permute.xlu0 %168
        %v171 = vlaneseq
        %v172 = vshrl.u32 %v171, 7
        %v173 = vsub.s32 0, %v172
        %v174 = vrot.slane %v164, %v173
        %v175 = vmul.f32 %v169, %v174
        %176 = vset.pattern.permute.xlu0 1
        %177 = vperm.xlu0 %176, %v165
        %v178 = vpop.permute.xlu0 %177
        %v180 = vlaneseq
        %v181 = vshrl.u32 %v180, 7
        %v182 = vsub.s32 1, %v181
        %v183 = vrot.slane %v164, %v182
        %v184 = vmul.f32 %v178, %v183
        %v185 = vadd.f32 %v175, %v184
        %186 = vset.pattern.permute.xlu0 2
        %187 = vperm.xlu0 %186, %v165
        %v188 = vpop.permute.xlu0 %187
        %v190 = vlaneseq
        %v191 = vshrl.u32 %v190, 7
        %v192 = vsub.s32 2, %v191
        %v193 = vrot.slane %v164, %v192
        %v194 = vmul.f32 %v188, %v193
        %v195 = vadd.f32 %v185, %v194
        %196 = vset.pattern.permute.xlu0 3
        %197 = vperm.xlu0 %196, %v165
        %v198 = vpop.permute.xlu0 %197
        %v200 = vlaneseq
        %v201 = vshrl.u32 %v200, 7
        %v202 = vsub.s32 3, %v201
        %v203 = vrot.slane %v164, %v202
        %v204 = vmul.f32 %v198, %v203
        %v205 = vadd.f32 %v195, %v204
        %vm206 = vcmask 523264
        %207 = vst.msk [vmem:[%s156] sm:$0xff] %vm206, %v205
        %s208 = sand.u32 %s87, 1
        %s209 = scalar_lea.sflag [#allocation3], %s208
        %s210 = sand.u32 %s87, 1
        %s211 = smul.addr %s210, 8
        %s212 = scalar_lea.vmem [#allocation2], %s211
        // Predicated region
        $region29: #{tpu_custom_call.1} parent=27 // pred_check
          %p213 = pneg %p97
        $region30: #{tpu_custom_call.1} parent=27 // pred_check_branch
          %215 = sbr.rel (%p213) target = $region32
        $region31: #{tpu_custom_call.1} parent=27 // pred_region
          %s217 = ssub.s32 128, 128
          %218 = vsyncadd %s209, %s217
          %s219 = sadd.s32 %s21, %s20
          %s220 = smul.addr %s219, 128
          %s221 = scalar_lea.hbm %s2, %s220
          %s223 = sshll.u32 %s212, 4
          %s224 = int_to_ptr.vmem [resolvable:$true] %s223
          %226 = dma.vmem_to_hbm [thread:$0]  %s224, 128, %s221, %s209
        $region32: #{tpu_custom_call.1} parent=27 // pred_fallthru
          _
      $region28: #{tpu_custom_call.1} parent=5 // pred_fallthru
        _
      %p227 = scmp.le.s32.totalorder 2, %s11
      // Predicated region
      $region33: #{tpu_custom_call.1} parent=5 // pred_check
        %p228 = pneg %p227
      $region34: #{tpu_custom_call.1} parent=5 // pred_check_branch
        %230 = sbr.rel (%p228) target = $region36
      $region35: #{tpu_custom_call.1} parent=5 // pred_region
        %s231 = ssub.s32 %s11, 2
        // Predicated region
        $region37: #{tpu_custom_call.1} parent=35 // pred_check
          %p232 = pneg %p103
        $region38: #{tpu_custom_call.1} parent=35 // pred_check_branch
          %234 = sbr.rel (%p232) target = $region40
        $region39: #{tpu_custom_call.1} parent=35 // pred_region
          %s235 = sand.u32 %s88, 1
          %s236 = scalar_lea.sflag [#allocation3], %s235
          %s237 = sand.u32 %s88, 1
          %s238 = smul.addr %s237, 8
          %s239 = scalar_lea.vmem [#allocation2], %s238
          %240 = dma.done %s236, 128
        $region40: #{tpu_custom_call.1} parent=35 // pred_fallthru
          _
      $region36: #{tpu_custom_call.1} parent=5 // pred_fallthru
        _
    $region6: #{tpu_custom_call.1} parent=1 // loop_footer
      %s15 = sadd.s32 1, %s11
    $region7: #{tpu_custom_call.1} parent=1 // loop_footer_branch
      %10 = sbr.rel target = $region3
    $region8: #{tpu_custom_call.1} parent=1 // loop_exit
      _
    %241 = vsyncpa [#allocation3], 1
    %s242 = scalar_lea.sflag [#allocation3], 1
    %243 = vsyncpa %s242, 1

</llo_original>
